<compile_context>
chip_gen: v7x
topology: tpu7x:2x2x1
jax: 0.10.0
libtpu: 0.0.40
codegen_flags: <defaults>
</compile_context>

<pallas_src>
import functools

import jax
import jax.numpy as jnp
from jax.experimental import pallas as pl
from jax.experimental.pallas import tpu as pltpu


def _round_up(x, m):
    return (x + m - 1) // m * m


def mlp_kernel(x_ref, w1_ref, b1_ref, w2_ref, b2_ref, w3_ref, b3_ref, o_ref,
               *, out_size):
    """One batch tile: x (TB, INP) f32 -> log-probs (TB, OUTP) f32."""
    # bf16 operands for the MXU, f32 accumulation.
    x = x_ref[...].astype(jnp.bfloat16)

    # fc1 + ReLU
    h1 = jnp.dot(x, w1_ref[...], preferred_element_type=jnp.float32)
    h1 = jnp.maximum(h1 + b1_ref[...], 0.0).astype(jnp.bfloat16)

    # fc2 + ReLU
    h2 = jnp.dot(h1, w2_ref[...], preferred_element_type=jnp.float32)
    h2 = jnp.maximum(h2 + b2_ref[...], 0.0).astype(jnp.bfloat16)

    # output layer (padded to OUTP lanes)
    logits = jnp.dot(h2, w3_ref[...], preferred_element_type=jnp.float32)
    logits = logits + b3_ref[...]

    # Mask padded class lanes to -inf so the normalization only sees real classes
    # (padded lanes would otherwise contribute logit==0 to max/sum).
    lane = jax.lax.broadcasted_iota(jnp.int32, logits.shape, dimension=1)
    logits = jnp.where(lane < out_size, logits, -jnp.inf)

    # Numerically stable log_softmax along the class axis.
    m = jnp.max(logits, axis=-1, keepdims=True)
    shifted = logits - m
    lse = jnp.log(jnp.sum(jnp.exp(shifted), axis=-1, keepdims=True))
    o_ref[...] = (shifted - lse).astype(o_ref.dtype)


def my_awesome_model_forward(x, params, *, batch_tile=256):
    """x: (B, C, H, W) float32 (NCHW, like PyTorch). Returns (B, output_size) f32."""
    w1, b1, w2, b2, w3, b3 = params
    B = x.shape[0]
    x_flat = x.reshape(B, -1).astype(jnp.float32)          # x.view(x.shape[0], -1)
    in_size = x_flat.shape[1]
    h1_size, h2_size, out_size = w1.shape[0], w2.shape[0], w3.shape[0]

    # Lane-dense padded feature dims (multiples of 128).
    INP = _round_up(in_size, 128)
    H1P = _round_up(h1_size, 128)
    H2P = _round_up(h2_size, 128)
    OUTP = _round_up(out_size, 128)

    # Pre-transpose (PyTorch (out,in) -> (in,out)), zero-pad, cast to bf16 once.
    def prep_w(w, in_p, out_p):
        wt = w.T.astype(jnp.bfloat16)
        return jnp.pad(wt, ((0, in_p - wt.shape[0]), (0, out_p - wt.shape[1])))

    def prep_b(b, out_p):
        return jnp.pad(b.astype(jnp.float32), (0, out_p - b.shape[0])).reshape(1, out_p)

    w1t = prep_w(w1, INP, H1P)
    w2t = prep_w(w2, H1P, H2P)
    w3t = prep_w(w3, H2P, OUTP)
    b1r = prep_b(b1, H1P)
    b2r = prep_b(b2, H2P)
    b3r = prep_b(b3, OUTP)

    # Pad the input feature dim to match the padded w1 rows (zeros contribute nothing).
    if INP != in_size:
        x_flat = jnp.pad(x_flat, ((0, 0), (0, INP - in_size)))

    # Batch tiling: sublane-aligned tile, pad B up to a multiple of it.
    TB = min(batch_tile, _round_up(B, 8))
    Bp = _round_up(B, TB)
    if Bp != B:
        x_flat = jnp.pad(x_flat, ((0, Bp - B), (0, 0)))
    grid = (Bp // TB,)

    kernel = functools.partial(mlp_kernel, out_size=out_size)

    flops = 2 * Bp * (INP * H1P + H1P * H2P + H2P * OUTP)
    bytes_accessed = (
        x_flat.size * 4
        + (w1t.size + w2t.size + w3t.size) * 2
        + (b1r.size + b2r.size + b3r.size) * 4
        + Bp * OUTP * 4
    )
    cost = pl.CostEstimate(flops=flops,
                           transcendentals=Bp * OUTP,
                           bytes_accessed=bytes_accessed)

    const_map = lambda i: (0, 0)     # weights / biases stay resident across the grid

    out_padded = pl.pallas_call(
        kernel,
        out_shape=jax.ShapeDtypeStruct((Bp, OUTP), jnp.float32),
        grid_spec=pltpu.PrefetchScalarGridSpec(
            num_scalar_prefetch=0,
            grid=grid,
            in_specs=[
                pl.BlockSpec((TB, INP), lambda i: (i, 0)),   # x tile (pipelined)
                pl.BlockSpec((INP, H1P), const_map),
                pl.BlockSpec((1, H1P), const_map),
                pl.BlockSpec((H1P, H2P), const_map),
                pl.BlockSpec((1, H2P), const_map),
                pl.BlockSpec((H2P, OUTP), const_map),
                pl.BlockSpec((1, OUTP), const_map),
            ],
            out_specs=pl.BlockSpec((TB, OUTP), lambda i: (i, 0)),
        ),
        compiler_params=pltpu.CompilerParams(
            dimension_semantics=("parallel",),
            vmem_limit_bytes=32 << 20,
        ),
        cost_estimate=cost,
    )(x_flat, w1t, b1r, w2t, b2r, w3t, b3r)

    # Drop batch padding and padded class lanes.
    return out_padded[:B, :out_size]


def init_params(key, input_size, hidden_units1, hidden_units2, output_size):
    """Deterministic init mimicking nn.Linear's U(-1/sqrt(fan_in), 1/sqrt(fan_in))."""
    def linear_init(k, out_f, in_f):
        kw, kb = jax.random.split(k)
        bound = 1.0 / jnp.sqrt(jnp.float32(in_f))
        w = jax.random.uniform(kw, (out_f, in_f), jnp.float32, -bound, bound)
        b = jax.random.uniform(kb, (out_f,), jnp.float32, -bound, bound)
        return w, b

    k1, k2, k3 = jax.random.split(key, 3)
    w1, b1 = linear_init(k1, hidden_units1, input_size)
    w2, b2 = linear_init(k2, hidden_units2, hidden_units1)
    w3, b3 = linear_init(k3, output_size, hidden_units2)
    return (w1, b1, w2, b2, w3, b3)


def reference_forward(x, params):
    """Pure-JAX f32 reference matching the PyTorch module."""
    w1, b1, w2, b2, w3, b3 = params
    xf = x.reshape(x.shape[0], -1)
    h1 = jnp.maximum(xf @ w1.T + b1, 0.0)
    h2 = jnp.maximum(h1 @ w2.T + b2, 0.0)
    logits = h2 @ w3.T + b3
    return jax.nn.log_softmax(logits, axis=1)


if __name__ == "__main__":
    # Small MNIST-like shapes: batch=2, 1x16x16 "images", hidden 64/32, 10 classes.
    B, C, H, W = 2, 1, 16, 16
    input_size = C * H * W          # 256
    hidden_units1 = 64
    hidden_units2 = 32
    output_size = 10

    key = jax.random.PRNGKey(0)
    k_x, k_p = jax.random.split(key)
    x = jax.random.normal(k_x, (B, C, H, W), jnp.float32)
    params = init_params(k_p, input_size, hidden_units1, hidden_units2, output_size)

    out = my_awesome_model_forward(x, params)
    jax.block_until_ready(out)

    assert out.shape == (B, output_size)

    # Rows must sum to 1 in probability space (log_softmax normalization is exact in f32).
    probs_sum = jnp.sum(jnp.exp(out), axis=1)
    assert bool(jnp.all(jnp.abs(probs_sum - 1.0) < 1e-4))

    # Match the f32 reference (bf16 matmul operands -> loose tolerance).
    ref = reference_forward(x, params)
    assert bool(jnp.max(jnp.abs(out - ref)) < 1e-1)

    print("KERNEL_OK")
</pallas_src>

<mosaic_0001>
module attributes {stable_mosaic.version = 11 : i64} {
  func.func @mlp_kernel(%arg0: i32, %arg1: memref<8x256xf32, #tpu.memory_space<vmem>>, %arg2: memref<256x128xbf16, #tpu.memory_space<vmem>>, %arg3: memref<1x128xf32, #tpu.memory_space<vmem>>, %arg4: memref<128x128xbf16, #tpu.memory_space<vmem>>, %arg5: memref<1x128xf32, #tpu.memory_space<vmem>>, %arg6: memref<128x128xbf16, #tpu.memory_space<vmem>>, %arg7: memref<1x128xf32, #tpu.memory_space<vmem>>, %arg8: memref<8x128xf32, #tpu.memory_space<vmem>>) attributes {dimension_semantics = [#tpu.dimension_semantics<parallel>], iteration_bounds = array<i64: 1>, scalar_prefetch = 0 : i64, scratch_operands = 0 : i64, tpu.core_type = #tpu.core_type<tc>, window_params = [{transform_indices = @transform_0, window_bounds = array<i64: 8, 256>}, {pipeline_mode = #tpu.pipeline_mode<synchronous>, transform_indices = @transform_1, window_bounds = array<i64: 256, 128>}, {pipeline_mode = #tpu.pipeline_mode<synchronous>, transform_indices = @transform_2, window_bounds = array<i64: 1, 128>}, {pipeline_mode = #tpu.pipeline_mode<synchronous>, transform_indices = @transform_3, window_bounds = array<i64: 128, 128>}, {pipeline_mode = #tpu.pipeline_mode<synchronous>, transform_indices = @transform_4, window_bounds = array<i64: 1, 128>}, {pipeline_mode = #tpu.pipeline_mode<synchronous>, transform_indices = @transform_5, window_bounds = array<i64: 128, 128>}, {pipeline_mode = #tpu.pipeline_mode<synchronous>, transform_indices = @transform_6, window_bounds = array<i64: 1, 128>}, {transform_indices = @transform_7, window_bounds = array<i64: 8, 128>}]} {
    %c0 = arith.constant 0 : index
    %c0_0 = arith.constant 0 : index
    %0 = vector.load %arg1[%c0, %c0_0] : memref<8x256xf32, #tpu.memory_space<vmem>>, vector<8x256xf32>
    %1 = arith.truncf %0 : vector<8x256xf32> to vector<8x256xbf16>
    %c0_1 = arith.constant 0 : index
    %c0_2 = arith.constant 0 : index
    %2 = vector.load %arg2[%c0_1, %c0_2] : memref<256x128xbf16, #tpu.memory_space<vmem>>, vector<256x128xbf16>
    %cst = arith.constant dense<0.000000e+00> : vector<8x128xf32>
    %3 = tpu.matmul %1, %2, %cst {dimension_numbers = #tpu.dot_dimension_numbers<[1], [0], [0], [1], [0, 0, 1, 1], [], []>} : vector<8x256xbf16>, vector<256x128xbf16>, vector<8x128xf32> -> vector<8x128xf32>
    %c0_3 = arith.constant 0 : index
    %c0_4 = arith.constant 0 : index
    %4 = vector.load %arg3[%c0_3, %c0_4] : memref<1x128xf32, #tpu.memory_space<vmem>>, vector<1x128xf32>
    %5 = vector.broadcast %4 : vector<1x128xf32> to vector<8x128xf32>
    %6 = arith.addf %3, %5 : vector<8x128xf32>
    %cst_5 = arith.constant 0.000000e+00 : f32
    %7 = vector.broadcast %cst_5 : f32 to vector<8x128xf32>
    %8 = arith.maximumf %6, %7 : vector<8x128xf32>
    %9 = arith.truncf %8 : vector<8x128xf32> to vector<8x128xbf16>
    %c0_6 = arith.constant 0 : index
    %c0_7 = arith.constant 0 : index
    %10 = vector.load %arg4[%c0_6, %c0_7] : memref<128x128xbf16, #tpu.memory_space<vmem>>, vector<128x128xbf16>
    %cst_8 = arith.constant dense<0.000000e+00> : vector<8x128xf32>
    %11 = tpu.matmul %9, %10, %cst_8 {dimension_numbers = #tpu.dot_dimension_numbers<[1], [0], [0], [1], [0, 0, 1, 1], [], []>} : vector<8x128xbf16>, vector<128x128xbf16>, vector<8x128xf32> -> vector<8x128xf32>
    %c0_9 = arith.constant 0 : index
    %c0_10 = arith.constant 0 : index
    %12 = vector.load %arg5[%c0_9, %c0_10] : memref<1x128xf32, #tpu.memory_space<vmem>>, vector<1x128xf32>
    %13 = vector.broadcast %12 : vector<1x128xf32> to vector<8x128xf32>
    %14 = arith.addf %11, %13 : vector<8x128xf32>
    %cst_11 = arith.constant 0.000000e+00 : f32
    %15 = vector.broadcast %cst_11 : f32 to vector<8x128xf32>
    %16 = arith.maximumf %14, %15 : vector<8x128xf32>
    %17 = arith.truncf %16 : vector<8x128xf32> to vector<8x128xbf16>
    %c0_12 = arith.constant 0 : index
    %c0_13 = arith.constant 0 : index
    %18 = vector.load %arg6[%c0_12, %c0_13] : memref<128x128xbf16, #tpu.memory_space<vmem>>, vector<128x128xbf16>
    %cst_14 = arith.constant dense<0.000000e+00> : vector<8x128xf32>
    %19 = tpu.matmul %17, %18, %cst_14 {dimension_numbers = #tpu.dot_dimension_numbers<[1], [0], [0], [1], [0, 0, 1, 1], [], []>} : vector<8x128xbf16>, vector<128x128xbf16>, vector<8x128xf32> -> vector<8x128xf32>
    %c0_15 = arith.constant 0 : index
    %c0_16 = arith.constant 0 : index
    %20 = vector.load %arg7[%c0_15, %c0_16] : memref<1x128xf32, #tpu.memory_space<vmem>>, vector<1x128xf32>
    %21 = vector.broadcast %20 : vector<1x128xf32> to vector<8x128xf32>
    %22 = arith.addf %19, %21 : vector<8x128xf32>
    %23 = tpu.iota {dimensions = array<i32: 1>} : vector<8x128xi32>
    %c10_i32 = arith.constant 10 : i32
    %24 = vector.broadcast %c10_i32 : i32 to vector<8x128xi32>
    %25 = arith.cmpi slt, %23, %24 : vector<8x128xi32>
    %cst_17 = arith.constant 0xFF800000 : f32
    %26 = vector.broadcast %cst_17 : f32 to vector<8x128xf32>
    %27 = arith.select %25, %22, %26 : vector<8x128xi1>, vector<8x128xf32>
    %cst_18 = arith.constant dense<0xFF800000> : vector<8xf32>
    %28 = vector.multi_reduction <maximumf>, %27, %cst_18 [1] : vector<8x128xf32> to vector<8xf32>
    %29 = vector.shape_cast %28 : vector<8xf32> to vector<8x1xf32>
    %30 = vector.broadcast %29 : vector<8x1xf32> to vector<8x128xf32>
    %31 = arith.subf %27, %30 : vector<8x128xf32>
    %32 = math.exp %31 : vector<8x128xf32>
    %cst_19 = arith.constant dense<0.000000e+00> : vector<8xf32>
    %33 = vector.multi_reduction <add>, %32, %cst_19 [1] : vector<8x128xf32> to vector<8xf32>
    %34 = vector.shape_cast %33 : vector<8xf32> to vector<8x1xf32>
    %35 = math.log %34 : vector<8x1xf32>
    %36 = vector.broadcast %35 : vector<8x1xf32> to vector<8x128xf32>
    %37 = arith.subf %31, %36 : vector<8x128xf32>
    %c0_20 = arith.constant 0 : index
    %c0_21 = arith.constant 0 : index
    %38 = vector.load %arg8[%c0_20, %c0_21] : memref<8x128xf32, #tpu.memory_space<vmem>>, vector<8x128xf32>
    tpu.vector_store %arg8[%c0_20, %c0_21], %37 {strides = array<i32>} : memref<8x128xf32, #tpu.memory_space<vmem>>, vector<8x128xf32>,
    return
  }
  func.func @transform_0(%arg0: i32) -> (i32, i32) {
    %c0_i32 = arith.constant 0 : i32
    %c0_i32_0 = arith.constant 0 : i32
    return %arg0, %c0_i32 : i32, i32
  }
  func.func @transform_1(%arg0: i32) -> (i32, i32) {
    %c0_i32 = arith.constant 0 : i32
    %c0_i32_0 = arith.constant 0 : i32
    %c0_i32_1 = arith.constant 0 : i32
    return %c0_i32, %c0_i32_0 : i32, i32
  }
  func.func @transform_2(%arg0: i32) -> (i32, i32) {
    %c0_i32 = arith.constant 0 : i32
    %c0_i32_0 = arith.constant 0 : i32
    %c0_i32_1 = arith.constant 0 : i32
    return %c0_i32, %c0_i32_0 : i32, i32
  }
  func.func @transform_3(%arg0: i32) -> (i32, i32) {
    %c0_i32 = arith.constant 0 : i32
    %c0_i32_0 = arith.constant 0 : i32
    %c0_i32_1 = arith.constant 0 : i32
    return %c0_i32, %c0_i32_0 : i32, i32
  }
  func.func @transform_4(%arg0: i32) -> (i32, i32) {
    %c0_i32 = arith.constant 0 : i32
    %c0_i32_0 = arith.constant 0 : i32
    %c0_i32_1 = arith.constant 0 : i32
    return %c0_i32, %c0_i32_0 : i32, i32
  }
  func.func @transform_5(%arg0: i32) -> (i32, i32) {
    %c0_i32 = arith.constant 0 : i32
    %c0_i32_0 = arith.constant 0 : i32
    %c0_i32_1 = arith.constant 0 : i32
    return %c0_i32, %c0_i32_0 : i32, i32
  }
  func.func @transform_6(%arg0: i32) -> (i32, i32) {
    %c0_i32 = arith.constant 0 : i32
    %c0_i32_0 = arith.constant 0 : i32
    %c0_i32_1 = arith.constant 0 : i32
    return %c0_i32, %c0_i32_0 : i32, i32
  }
  func.func @transform_7(%arg0: i32) -> (i32, i32) {
    %c0_i32 = arith.constant 0 : i32
    %c0_i32_0 = arith.constant 0 : i32
    return %arg0, %c0_i32 : i32, i32
  }
}

</mosaic_0001>

<llo_original>
// kernel: tpu_custom_call.1
$region0: #{tpu_custom_call.1}
  #allocation0 [shape = 'u32[]', space=smem, size = 0x4, offset = 0x4, fixed_abs, tag = 'smem constant byte address 0x4 - core index']
  #allocation1 [shape = 'u32[144,128]{1,0:T(1,128)}', space=vmem, size = 0x12000, scoped, tag = 'internal scratch']
  %s0 = inlined_call_operand.hbm [shape: f32[8,256], index: 0, kind: input, shape index: {}]
  %s1 = inlined_call_operand.hbm [shape: bf16[256,128], index: 1, kind: input, shape index: {}]
  %s2 = inlined_call_operand.vmem [shape: f32[1,128], index: 2, kind: input, shape index: {}]
  %s3 = inlined_call_operand.hbm [shape: bf16[128,128], index: 3, kind: input, shape index: {}]
  %s4 = inlined_call_operand.vmem [shape: f32[1,128], index: 4, kind: input, shape index: {}]
  %s5 = inlined_call_operand.hbm [shape: bf16[128,128], index: 5, kind: input, shape index: {}]
  %s6 = inlined_call_operand.vmem [shape: f32[1,128], index: 6, kind: input, shape index: {}]
  %s7 = inlined_call_operand.hbm [shape: f32[8,128], index: 7, kind: output, shape index: {}]
  %s8 = sld [smem:[#allocation0]]
  $region54: #{tpu_custom_call.1} parent=0
    _
  %s10 = ssub.s32 1, %s8
  %s11 = scalar_select 0, %s10, %s8
  $region1: #{tpu_custom_call.1} parent=0
    #allocation2 [shape = 'u8[8192]{0}', space=vmem, size = 0x2000, scoped, tag = 'input window, operand 0, single buffered']
    #allocation3 [shape = 's32[1]{0}', space=sflag, size = 0x4, scoped, tag = 'scoped memory for tpu_custom_call.1']
    #allocation4 [shape = 's32[1]{0}', space=sflag, size = 0x4, scoped, tag = 'scoped memory for tpu_custom_call.1']
    #allocation5 [shape = 'u8[65536]{0}', space=vmem, size = 0x10000, scoped, tag = 'input window, operand 1, single buffered']
    #allocation6 [shape = 's32[1]{0}', space=sflag, size = 0x4, scoped, tag = 'scoped memory for tpu_custom_call.1']
    #allocation7 [shape = 'u8[32768]{0}', space=vmem, size = 0x8000, scoped, tag = 'input window, operand 3, single buffered']
    #allocation8 [shape = 'u8[32768]{0}', space=vmem, size = 0x8000, scoped, tag = 'input window, operand 5, single buffered']
    #allocation9 [shape = 's32[1]{0}', space=sflag, size = 0x4, scoped, tag = 'scoped memory for tpu_custom_call.1']
    #allocation10 [shape = 'u8[4096]{0}', space=vmem, size = 0x1000, scoped, tag = 'output window, operand 0, single buffered']
    %12 = vsyncpa [#allocation3], 0
    %13 = vsyncpa [#allocation6], 0
    %14 = vsyncpa [#allocation9], 0
    %15 = vsyncpa [#allocation4], 0
    // Predicated region
    $region2: #{tpu_custom_call.1} parent=1 // pred_check
      _
    $region3: #{tpu_custom_call.1} parent=1 // pred_check_branch
      %17 = sbr.rel (0) target = $region5
    $region4: #{tpu_custom_call.1} parent=1 // pred_region
      %s19 = ssub.s32 256, 256
      %20 = vsyncadd [#allocation3], %s19
      %s22 = sshll.u32 [#allocation2], 4
      %s23 = int_to_ptr.vmem [resolvable:$true] %s22
      %25 = dma.hbm_to_vmem [thread:$0]  %s0, 256, %s23, [#allocation3]
    $region5: #{tpu_custom_call.1} parent=1 // pred_fallthru
      _
    // Predicated region
    $region6: #{tpu_custom_call.1} parent=1 // pred_check
      _
    $region7: #{tpu_custom_call.1} parent=1 // pred_check_branch
      %27 = sbr.rel (0) target = $region9
    $region8: #{tpu_custom_call.1} parent=1 // pred_region
      %s29 = ssub.s32 2048, 2048
      %30 = vsyncadd [#allocation6], %s29
      %s31 = sshll.u32 [#allocation5], 4
      %s32 = int_to_ptr.vmem [resolvable:$true] %s31
      %37 = dma.hbm_to_vmem [thread:$0]  %s1, 2048, %s32, [#allocation6], 64, 64, 4
    $region9: #{tpu_custom_call.1} parent=1 // pred_fallthru
      _
    // Predicated region
    $region10: #{tpu_custom_call.1} parent=1 // pred_check
      _
    $region11: #{tpu_custom_call.1} parent=1 // pred_check_branch
      %39 = sbr.rel (0) target = $region13
    $region12: #{tpu_custom_call.1} parent=1 // pred_region
      _
    $region13: #{tpu_custom_call.1} parent=1 // pred_fallthru
      _
    // Predicated region
    $region14: #{tpu_custom_call.1} parent=1 // pred_check
      _
    $region15: #{tpu_custom_call.1} parent=1 // pred_check_branch
      %41 = sbr.rel (0) target = $region17
    $region16: #{tpu_custom_call.1} parent=1 // pred_region
      %s43 = ssub.s32 1024, 1024
      %44 = vsyncadd [#allocation6], %s43
      %s45 = sshll.u32 [#allocation7], 4
      %s46 = int_to_ptr.vmem [resolvable:$true] %s45
      %51 = dma.hbm_to_vmem [thread:$0]  %s3, 1024, %s46, [#allocation6], 64, 64, 4
    $region17: #{tpu_custom_call.1} parent=1 // pred_fallthru
      _
    // Predicated region
    $region18: #{tpu_custom_call.1} parent=1 // pred_check
      _
    $region19: #{tpu_custom_call.1} parent=1 // pred_check_branch
      %53 = sbr.rel (0) target = $region21
    $region20: #{tpu_custom_call.1} parent=1 // pred_region
      _
    $region21: #{tpu_custom_call.1} parent=1 // pred_fallthru
      _
    // Predicated region
    $region22: #{tpu_custom_call.1} parent=1 // pred_check
      _
    $region23: #{tpu_custom_call.1} parent=1 // pred_check_branch
      %55 = sbr.rel (0) target = $region25
    $region24: #{tpu_custom_call.1} parent=1 // pred_region
      %s57 = ssub.s32 1024, 1024
      %58 = vsyncadd [#allocation9], %s57
      %s59 = sshll.u32 [#allocation8], 4
      %s60 = int_to_ptr.vmem [resolvable:$true] %s59
      %65 = dma.hbm_to_vmem [thread:$0]  %s5, 1024, %s60, [#allocation9], 64, 64, 4
    $region25: #{tpu_custom_call.1} parent=1 // pred_fallthru
      _
    // Predicated region
    $region26: #{tpu_custom_call.1} parent=1 // pred_check
      _
    $region27: #{tpu_custom_call.1} parent=1 // pred_check_branch
      %67 = sbr.rel (0) target = $region29
    $region28: #{tpu_custom_call.1} parent=1 // pred_region
      _
    $region29: #{tpu_custom_call.1} parent=1 // pred_fallthru
      _
    // Predicated region
    $region30: #{tpu_custom_call.1} parent=1 // pred_check
      _
    $region31: #{tpu_custom_call.1} parent=1 // pred_check_branch
      %69 = sbr.rel (0) target = $region33
    $region32: #{tpu_custom_call.1} parent=1 // pred_region
      %70 = dma.done [#allocation3], 256
    $region33: #{tpu_custom_call.1} parent=1 // pred_fallthru
      _
    // Predicated region
    $region34: #{tpu_custom_call.1} parent=1 // pred_check
      _
    $region35: #{tpu_custom_call.1} parent=1 // pred_check_branch
      %72 = sbr.rel (0) target = $region37
    $region36: #{tpu_custom_call.1} parent=1 // pred_region
      %73 = dma.done [#allocation6], 2048
    $region37: #{tpu_custom_call.1} parent=1 // pred_fallthru
      _
    // Predicated region
    $region38: #{tpu_custom_call.1} parent=1 // pred_check
      _
    $region39: #{tpu_custom_call.1} parent=1 // pred_check_branch
      %75 = sbr.rel (0) target = $region41
    $region40: #{tpu_custom_call.1} parent=1 // pred_region
      %76 = dma.done [#allocation6], 1024
    $region41: #{tpu_custom_call.1} parent=1 // pred_fallthru
      _
    // Predicated region
    $region42: #{tpu_custom_call.1} parent=1 // pred_check
      _
    $region43: #{tpu_custom_call.1} parent=1 // pred_check_branch
      %78 = sbr.rel (0) target = $region45
    $region44: #{tpu_custom_call.1} parent=1 // pred_region
      %79 = dma.done [#allocation9], 1024
    $region45: #{tpu_custom_call.1} parent=1 // pred_fallthru
      _
    %v81 = vld [vmem:[#allocation2] sm:$0xff]
    %v82 = vld [vmem:[#allocation2 + $0x8] sm:$0xff]
    %v83 = vpack.c.bf16 %v81, %v81
    %v84 = vpack.c.bf16 %v82, %v82
    %v85 = vld [vmem:[#allocation5] sm:$0xf]
    %v86 = vld [vmem:[#allocation5 + $0x4] sm:$0xf]
    %v87 = vld [vmem:[#allocation5 + $0x8] sm:$0xf]
    %v88 = vld [vmem:[#allocation5 + $0xc] sm:$0xf]
    %v89 = vld [vmem:[#allocation5 + $0x10] sm:$0xf]
    %v90 = vld [vmem:[#allocation5 + $0x14] sm:$0xf]
    %v91 = vld [vmem:[#allocation5 + $0x18] sm:$0xf]
    %v92 = vld [vmem:[#allocation5 + $0x1c] sm:$0xf]
    %v93 = vld [vmem:[#allocation5 + $0x20] sm:$0xf]
    %v94 = vld [vmem:[#allocation5 + $0x24] sm:$0xf]
    %v95 = vld [vmem:[#allocation5 + $0x28] sm:$0xf]
    %v96 = vld [vmem:[#allocation5 + $0x2c] sm:$0xf]
    %v97 = vld [vmem:[#allocation5 + $0x30] sm:$0xf]
    %v98 = vld [vmem:[#allocation5 + $0x34] sm:$0xf]
    %v99 = vld [vmem:[#allocation5 + $0x38] sm:$0xf]
    %v100 = vld [vmem:[#allocation5 + $0x3c] sm:$0xf]
    %v101 = vld [vmem:[#allocation5 + $0x40] sm:$0xf]
    %v102 = vld [vmem:[#allocation5 + $0x44] sm:$0xf]
    %v103 = vld [vmem:[#allocation5 + $0x48] sm:$0xf]
    %v104 = vld [vmem:[#allocation5 + $0x4c] sm:$0xf]
    %v105 = vld [vmem:[#allocation5 + $0x50] sm:$0xf]
    %v106 = vld [vmem:[#allocation5 + $0x54] sm:$0xf]
    %v107 = vld [vmem:[#allocation5 + $0x58] sm:$0xf]
    %v108 = vld [vmem:[#allocation5 + $0x5c] sm:$0xf]
    %v109 = vld [vmem:[#allocation5 + $0x60] sm:$0xf]
    %v110 = vld [vmem:[#allocation5 + $0x64] sm:$0xf]
    %v111 = vld [vmem:[#allocation5 + $0x68] sm:$0xf]
    %v112 = vld [vmem:[#allocation5 + $0x6c] sm:$0xf]
    %v113 = vld [vmem:[#allocation5 + $0x70] sm:$0xf]
    %v114 = vld [vmem:[#allocation5 + $0x74] sm:$0xf]
    %v115 = vld [vmem:[#allocation5 + $0x78] sm:$0xf]
    %v116 = vld [vmem:[#allocation5 + $0x7c] sm:$0xf]
    %v117 = vld [vmem:[%s2] sm:$0x1]
    %v119 = vlaneseq
    %v120 = vshrl.u32 %v119, 7
    %v121 = vsub.s32 0, %v120
    %v122 = vrot.slane %v117, %v121
    %v156 = vunpack.c.l.b16 %v85
    %v157 = vunpack.c.l.b16 %v86
    %v158 = vunpack.c.l.b16 %v87
    %v159 = vunpack.c.l.b16 %v88
    %v160 = vunpack.c.l.b16 %v89
    %v161 = vunpack.c.l.b16 %v90
    %v162 = vunpack.c.l.b16 %v91
    %v163 = vunpack.c.l.b16 %v92
    %v164 = vunpack.c.l.b16 %v93
    %v165 = vunpack.c.l.b16 %v94
    %v166 = vunpack.c.l.b16 %v95
    %v167 = vunpack.c.l.b16 %v96
    %v168 = vunpack.c.l.b16 %v97
    %v169 = vunpack.c.l.b16 %v98
    %v170 = vunpack.c.l.b16 %v99
    %v171 = vunpack.c.l.b16 %v100
    %v172 = vunpack.c.l.b16 %v101
    %v173 = vunpack.c.l.b16 %v102
    %v174 = vunpack.c.l.b16 %v103
    %v175 = vunpack.c.l.b16 %v104
    %v176 = vunpack.c.l.b16 %v105
    %v177 = vunpack.c.l.b16 %v106
    %v178 = vunpack.c.l.b16 %v107
    %v179 = vunpack.c.l.b16 %v108
    %v180 = vunpack.c.l.b16 %v109
    %v181 = vunpack.c.l.b16 %v110
    %v182 = vunpack.c.l.b16 %v111
    %v183 = vunpack.c.l.b16 %v112
    %v184 = vunpack.c.l.b16 %v113
    %v185 = vunpack.c.l.b16 %v114
    %v186 = vunpack.c.l.b16 %v115
    %v187 = vunpack.c.l.b16 %v116
    %v188 = vpack.c.b16 %v157, %v156
    %v189 = vpack.c.b16 %v159, %v158
    %v190 = vpack.c.b16 %v161, %v160
    %v191 = vpack.c.b16 %v163, %v162
    %v192 = vpack.c.b16 %v165, %v164
    %v193 = vpack.c.b16 %v167, %v166
    %v194 = vpack.c.b16 %v169, %v168
    %v195 = vpack.c.b16 %v171, %v170
    %v196 = vpack.c.b16 %v173, %v172
    %v197 = vpack.c.b16 %v175, %v174
    %v198 = vpack.c.b16 %v177, %v176
    %v199 = vpack.c.b16 %v179, %v178
    %v200 = vpack.c.b16 %v181, %v180
    %v201 = vpack.c.b16 %v183, %v182
    %v202 = vpack.c.b16 %v185, %v184
    %v203 = vpack.c.b16 %v187, %v186
    %220 = vmatprep.subr.bf16.mxu0 0
    %221 = vmatpush1.bf16.msra.mxu0 %v188
    %222 = vmatprep.subr.bf16.mxu0 0
    %223 = vmatpush1.bf16.msra.mxu0 %v189
    %224 = vmatprep.subr.bf16.mxu0 0
    %225 = vmatpush1.bf16.msra.mxu0 %v190
    %226 = vmatprep.subr.bf16.mxu0 0
    %227 = vmatpush1.bf16.msra.mxu0 %v191
    %228 = vmatprep.subr.bf16.mxu0 0
    %229 = vmatpush1.bf16.msra.mxu0 %v192
    %230 = vmatprep.subr.bf16.mxu0 0
    %231 = vmatpush1.bf16.msra.mxu0 %v193
    %232 = vmatprep.subr.bf16.mxu0 0
    %233 = vmatpush1.bf16.msra.mxu0 %v194
    %234 = vmatprep.subr.bf16.mxu0 0
    %235 = vmatpush1.bf16.msra.mxu0 %v195
    %236 = vmatprep.subr.bf16.mxu0 0
    %237 = vmatpush1.bf16.msra.mxu0 %v196
    %238 = vmatprep.subr.bf16.mxu0 0
    %239 = vmatpush1.bf16.msra.mxu0 %v197
    %240 = vmatprep.subr.bf16.mxu0 0
    %241 = vmatpush1.bf16.msra.mxu0 %v198
    %242 = vmatprep.subr.bf16.mxu0 0
    %243 = vmatpush1.bf16.msra.mxu0 %v199
    %244 = vmatprep.subr.bf16.mxu0 0
    %245 = vmatpush1.bf16.msra.mxu0 %v200
    %246 = vmatprep.subr.bf16.mxu0 0
    %247 = vmatpush1.bf16.msra.mxu0 %v201
    %248 = vmatprep.subr.bf16.mxu0 0
    %249 = vmatpush1.bf16.msra.mxu0 %v202
    %250 = vmatprep.subr.bf16.mxu0 0
    %251 = vmatpush1.bf16.msra.mxu0 %v203
    %252 = vmatprep.mubr.bf16.mxu0 %v84
    %253 = vmatmul.mubr.bf16.gmra.mrb[0].mxu0 %v83
    %v254 = vpop.f32.mrb[0].mxu0
    %v255 = vadd.f32 %v122, %v254
    %v256 = vpop.f32.mrb[0].mxu0
    %v257 = vpop.f32.mrb[0].mxu0
    %v258 = vpop.f32.mrb[0].mxu0
    %259 = vdwg.mxu0
    %v260 = vmax.f32 %v255, 0.0
    %v261 = vpack.c.bf16 %v260, %v260
    %v262 = vld [vmem:[#allocation7] sm:$0xf]
    %v263 = vld [vmem:[#allocation7 + $0x4] sm:$0xf]
    %v264 = vld [vmem:[#allocation7 + $0x8] sm:$0xf]
    %v265 = vld [vmem:[#allocation7 + $0xc] sm:$0xf]
    %v266 = vld [vmem:[#allocation7 + $0x10] sm:$0xf]
    %v267 = vld [vmem:[#allocation7 + $0x14] sm:$0xf]
    %v268 = vld [vmem:[#allocation7 + $0x18] sm:$0xf]
    %v269 = vld [vmem:[#allocation7 + $0x1c] sm:$0xf]
    %v270 = vld [vmem:[#allocation7 + $0x20] sm:$0xf]
    %v271 = vld [vmem:[#allocation7 + $0x24] sm:$0xf]
    %v272 = vld [vmem:[#allocation7 + $0x28] sm:$0xf]
    %v273 = vld [vmem:[#allocation7 + $0x2c] sm:$0xf]
    %v274 = vld [vmem:[#allocation7 + $0x30] sm:$0xf]
    %v275 = vld [vmem:[#allocation7 + $0x34] sm:$0xf]
    %v276 = vld [vmem:[#allocation7 + $0x38] sm:$0xf]
    %v277 = vld [vmem:[#allocation7 + $0x3c] sm:$0xf]
    %v278 = vld [vmem:[%s4] sm:$0x1]
    %v280 = vlaneseq
    %v281 = vshrl.u32 %v280, 7
    %v282 = vsub.s32 0, %v281
    %v283 = vrot.slane %v278, %v282
    %v301 = vunpack.c.l.b16 %v262
    %v302 = vunpack.c.l.b16 %v263
    %v303 = vunpack.c.l.b16 %v264
    %v304 = vunpack.c.l.b16 %v265
    %v305 = vunpack.c.l.b16 %v266
    %v306 = vunpack.c.l.b16 %v267
    %v307 = vunpack.c.l.b16 %v268
    %v308 = vunpack.c.l.b16 %v269
    %v309 = vunpack.c.l.b16 %v270
    %v310 = vunpack.c.l.b16 %v271
    %v311 = vunpack.c.l.b16 %v272
    %v312 = vunpack.c.l.b16 %v273
    %v313 = vunpack.c.l.b16 %v274
    %v314 = vunpack.c.l.b16 %v275
    %v315 = vunpack.c.l.b16 %v276
    %v316 = vunpack.c.l.b16 %v277
    %v317 = vpack.c.b16 %v302, %v301
    %v318 = vpack.c.b16 %v304, %v303
    %v319 = vpack.c.b16 %v306, %v305
    %v320 = vpack.c.b16 %v308, %v307
    %v321 = vpack.c.b16 %v310, %v309
    %v322 = vpack.c.b16 %v312, %v311
    %v323 = vpack.c.b16 %v314, %v313
    %v324 = vpack.c.b16 %v316, %v315
    %333 = vmatprep.subr.bf16.mxu0 0
    %334 = vmatpush1.bf16.msra.mxu0 %v317
    %335 = vmatprep.subr.bf16.mxu0 0
    %336 = vmatpush1.bf16.msra.mxu0 %v318
    %337 = vmatprep.subr.bf16.mxu0 0
    %338 = vmatpush1.bf16.msra.mxu0 %v319
    %339 = vmatprep.subr.bf16.mxu0 0
    %340 = vmatpush1.bf16.msra.mxu0 %v320
    %341 = vmatprep.subr.bf16.mxu0 0
    %342 = vmatpush1.bf16.msra.mxu0 %v321
    %343 = vmatprep.subr.bf16.mxu0 0
    %344 = vmatpush1.bf16.msra.mxu0 %v322
    %345 = vmatprep.subr.bf16.mxu0 0
    %346 = vmatpush1.bf16.msra.mxu0 %v323
    %347 = vmatprep.subr.bf16.mxu0 0
    %348 = vmatpush1.bf16.msra.mxu0 %v324
    %349 = vmatprep.subr.bf16.mxu0 0
    %350 = vmatpush1.bf16.msra.mxu0 0
    %351 = vmatprep.subr.bf16.mxu0 0
    %352 = vmatpush1.bf16.msra.mxu0 0
    %353 = vmatprep.subr.bf16.mxu0 0
    %354 = vmatpush1.bf16.msra.mxu0 0
    %355 = vmatprep.subr.bf16.mxu0 0
    %356 = vmatpush1.bf16.msra.mxu0 0
    %357 = vmatprep.subr.bf16.mxu0 0
    %358 = vmatpush1.bf16.msra.mxu0 0
    %359 = vmatprep.subr.bf16.mxu0 0
    %360 = vmatpush1.bf16.msra.mxu0 0
    %361 = vmatprep.subr.bf16.mxu0 0
    %362 = vmatpush1.bf16.msra.mxu0 0
    %363 = vmatprep.subr.bf16.mxu0 0
    %364 = vmatpush1.bf16.msra.mxu0 0
    %365 = vmatprep.mubr.bf16.mxu0 0
    %366 = vmatmul.mubr.bf16.gmra.mrb[0].mxu0 %v261
    %v367 = vpop.f32.mrb[0].mxu0
    %v368 = vadd.f32 %v283, %v367
    %v369 = vpop.f32.mrb[0].mxu0
    %v370 = vpop.f32.mrb[0].mxu0
    %v371 = vpop.f32.mrb[0].mxu0
    %372 = vdwg.mxu0
    %v373 = vmax.f32 %v368, 0.0
    %v374 = vpack.c.bf16 %v373, %v373
    %v375 = vld [vmem:[#allocation8] sm:$0xf]
    %v376 = vld [vmem:[#allocation8 + $0x4] sm:$0xf]
    %v377 = vld [vmem:[#allocation8 + $0x8] sm:$0xf]
    %v378 = vld [vmem:[#allocation8 + $0xc] sm:$0xf]
    %v379 = vld [vmem:[#allocation8 + $0x10] sm:$0xf]
    %v380 = vld [vmem:[#allocation8 + $0x14] sm:$0xf]
    %v381 = vld [vmem:[#allocation8 + $0x18] sm:$0xf]
    %v382 = vld [vmem:[#allocation8 + $0x1c] sm:$0xf]
    %v383 = vld [vmem:[#allocation8 + $0x20] sm:$0xf]
    %v384 = vld [vmem:[#allocation8 + $0x24] sm:$0xf]
    %v385 = vld [vmem:[#allocation8 + $0x28] sm:$0xf]
    %v386 = vld [vmem:[#allocation8 + $0x2c] sm:$0xf]
    %v387 = vld [vmem:[#allocation8 + $0x30] sm:$0xf]
    %v388 = vld [vmem:[#allocation8 + $0x34] sm:$0xf]
    %v389 = vld [vmem:[#allocation8 + $0x38] sm:$0xf]
    %v390 = vld [vmem:[#allocation8 + $0x3c] sm:$0xf]
    %v391 = vld [vmem:[%s6] sm:$0x1]
    %v393 = vlaneseq
    %v394 = vshrl.u32 %v393, 7
    %v395 = vsub.s32 0, %v394
    %v396 = vrot.slane %v391, %v395
    %v414 = vunpack.c.l.b16 %v375
    %v415 = vunpack.c.l.b16 %v376
    %v416 = vunpack.c.l.b16 %v377
    %v417 = vunpack.c.l.b16 %v378
    %v418 = vunpack.c.l.b16 %v379
    %v419 = vunpack.c.l.b16 %v380
    %v420 = vunpack.c.l.b16 %v381
    %v421 = vunpack.c.l.b16 %v382
    %v422 = vunpack.c.l.b16 %v383
    %v423 = vunpack.c.l.b16 %v384
    %v424 = vunpack.c.l.b16 %v385
    %v425 = vunpack.c.l.b16 %v386
    %v426 = vunpack.c.l.b16 %v387
    %v427 = vunpack.c.l.b16 %v388
    %v428 = vunpack.c.l.b16 %v389
    %v429 = vunpack.c.l.b16 %v390
    %v430 = vpack.c.b16 %v415, %v414
    %v431 = vpack.c.b16 %v417, %v416
    %v432 = vpack.c.b16 %v419, %v418
    %v433 = vpack.c.b16 %v421, %v420
    %v434 = vpack.c.b16 %v423, %v422
    %v435 = vpack.c.b16 %v425, %v424
    %v436 = vpack.c.b16 %v427, %v426
    %v437 = vpack.c.b16 %v429, %v428
    %446 = vmatprep.subr.bf16.mxu0 0
    %447 = vmatpush1.bf16.msra.mxu0 %v430
    %448 = vmatprep.subr.bf16.mxu0 0
    %449 = vmatpush1.bf16.msra.mxu0 %v431
    %450 = vmatprep.subr.bf16.mxu0 0
    %451 = vmatpush1.bf16.msra.mxu0 %v432
    %452 = vmatprep.subr.bf16.mxu0 0
    %453 = vmatpush1.bf16.msra.mxu0 %v433
    %454 = vmatprep.subr.bf16.mxu0 0
    %455 = vmatpush1.bf16.msra.mxu0 %v434
    %456 = vmatprep.subr.bf16.mxu0 0
    %457 = vmatpush1.bf16.msra.mxu0 %v435
    %458 = vmatprep.subr.bf16.mxu0 0
    %459 = vmatpush1.bf16.msra.mxu0 %v436
    %460 = vmatprep.subr.bf16.mxu0 0
    %461 = vmatpush1.bf16.msra.mxu0 %v437
    %462 = vmatprep.subr.bf16.mxu0 0
    %463 = vmatpush1.bf16.msra.mxu0 0
    %464 = vmatprep.subr.bf16.mxu0 0
    %465 = vmatpush1.bf16.msra.mxu0 0
    %466 = vmatprep.subr.bf16.mxu0 0
    %467 = vmatpush1.bf16.msra.mxu0 0
    %468 = vmatprep.subr.bf16.mxu0 0
    %469 = vmatpush1.bf16.msra.mxu0 0
    %470 = vmatprep.subr.bf16.mxu0 0
    %471 = vmatpush1.bf16.msra.mxu0 0
    %472 = vmatprep.subr.bf16.mxu0 0
    %473 = vmatpush1.bf16.msra.mxu0 0
    %474 = vmatprep.subr.bf16.mxu0 0
    %475 = vmatpush1.bf16.msra.mxu0 0
    %476 = vmatprep.subr.bf16.mxu0 0
    %477 = vmatpush1.bf16.msra.mxu0 0
    %478 = vmatprep.mubr.bf16.mxu0 0
    %479 = vmatmul.mubr.bf16.gmra.mrb[0].mxu0 %v374
    %v480 = vpop.f32.mrb[0].mxu0
    %v481 = vadd.f32 %v396, %v480
    %v482 = vpop.f32.mrb[0].mxu0
    %v483 = vpop.f32.mrb[0].mxu0
    %v484 = vpop.f32.mrb[0].mxu0
    %485 = vdwg.mxu0
    %v486 = vlaneseq
    %v487 = vand.u32 %v486, 127
    %vm488 = vcmp.lt.s32.totalorder %v487, 10
    %v489 = vsel %vm488, %v481, -inf
    %490 = vmax.xlane.f32.xlu0 %v489
    %v491 = vpop.xlane.xlu0 %490
    %v492 = vsub.f32 %v489, %v491
    %v493 = vmul.f32 %v492, 1.442695
    %v494 = vpow.pop %v493
    %495 = vadd.xlane.f32.xlu0 %v494
    %v496 = vpop.xlane.xlu0 %495
    %v497 = vlog2.pop %v496
    %v498 = vmul.f32 %v497, 0.6931472
    %v499 = vsub.f32 %v492, %v498
    %500 = vst [vmem:[#allocation10] sm:$0xff] %v499
    // Predicated region
    $region46: #{tpu_custom_call.1} parent=1 // pred_check
      _
    $region47: #{tpu_custom_call.1} parent=1 // pred_check_branch
      %502 = sbr.rel (0) target = $region49
    $region48: #{tpu_custom_call.1} parent=1 // pred_region
      %s504 = ssub.s32 128, 128
      %505 = vsyncadd [#allocation4], %s504
      %s507 = sshll.u32 [#allocation10], 4
      %s508 = int_to_ptr.vmem [resolvable:$true] %s507
      %510 = dma.vmem_to_hbm [thread:$0]  %s508, 128, %s7, [#allocation4]
    $region49: #{tpu_custom_call.1} parent=1 // pred_fallthru
      _
    // Predicated region
    $region50: #{tpu_custom_call.1} parent=1 // pred_check
      _
    $region51: #{tpu_custom_call.1} parent=1 // pred_check_branch
      %512 = sbr.rel (0) target = $region53
    $region52: #{tpu_custom_call.1} parent=1 // pred_region
      %513 = dma.done [#allocation4], 128
    $region53: #{tpu_custom_call.1} parent=1 // pred_fallthru
      _
    %514 = vsyncpa [#allocation3], 1
    %515 = vsyncpa [#allocation6], 1
    %516 = vsyncpa [#allocation9], 1
    %517 = vsyncpa [#allocation4], 1

</llo_original>
